<compile_context>
chip_gen: v6e
topology: v6e:2x2x1
jax: 0.10.0
libtpu: 0.0.40
codegen_flags: <defaults>
</compile_context>

<pallas_src>
import functools
import math

import numpy as np
import jax
import jax.numpy as jnp
from jax import lax
from jax.experimental import pallas as pl
from jax.experimental.pallas import tpu as pltpu

# Finite "-inf" proxy: avoids exp(-inf - (-inf)) = NaN for fully-masked rows.
NEG_LARGE = float(np.finfo(np.float32).min) / 2.0


def _flash_kernel(q_ref, k_ref, v_ref, o_ref, m_sc, l_sc, acc_sc, *,
                  scale, causal, block_q, block_k, seq_len, kv_padded,
                  mxu_dtype):
    # Block shapes: q_ref/o_ref -> (1, block_q, D); k_ref/v_ref -> (1, block_k, D).
    qi = pl.program_id(1)
    ki = pl.program_id(2)
    n_kv = pl.num_programs(2)

    @pl.when(ki == 0)
    def _init():
        m_sc[...] = jnp.full_like(m_sc, NEG_LARGE)
        l_sc[...] = jnp.zeros_like(l_sc)
        acc_sc[...] = jnp.zeros_like(acc_sc)

    q_start = qi * block_q
    kv_start = ki * block_k

    def _compute():
        # 1/sqrt(d_model) folded into Q (one [block_q, D] multiply), then cast
        # once so the MXU sees bf16 operands (f32 accumulate).
        q = (q_ref[0].astype(jnp.float32) * scale).astype(mxu_dtype)
        k = k_ref[0].astype(mxu_dtype)
        # Contract dim 1 of q with dim 1 of k -> no materialized K transpose.
        s = lax.dot_general(q, k, (((1,), (1,)), ((), ())),
                            preferred_element_type=jnp.float32)  # [bq, bk]

        keep = None
        if causal:
            row = q_start + lax.broadcasted_iota(jnp.int32, s.shape, 0)
            col = kv_start + lax.broadcasted_iota(jnp.int32, s.shape, 1)
            keep = col <= row
            if kv_padded:
                keep = keep & (col < seq_len)
        elif kv_padded:
            col = kv_start + lax.broadcasted_iota(jnp.int32, s.shape, 1)
            keep = col < seq_len
        if keep is not None:
            s = jnp.where(keep, s, NEG_LARGE)

        # Online (flash) softmax update; max / exp / sum stay in f32.
        m_prev = m_sc[...]
        m_new = jnp.maximum(m_prev, jnp.max(s, axis=-1, keepdims=True))
        alpha = jnp.exp(m_prev - m_new)
        p = jnp.exp(s - m_new)
        l_sc[...] = alpha * l_sc[...] + jnp.sum(p, axis=-1, keepdims=True)
        pv = jnp.dot(p.astype(mxu_dtype), v_ref[0].astype(mxu_dtype),
                     preferred_element_type=jnp.float32)
        acc_sc[...] = alpha * acc_sc[...] + pv
        m_sc[...] = m_new

    if causal:
        # Skip KV blocks that lie entirely above the diagonal for this q-block.
        @pl.when(kv_start <= q_start + block_q - 1)
        def _():
            _compute()
    else:
        _compute()

    @pl.when(ki == n_kv - 1)
    def _finalize():
        denom = l_sc[...]
        inv = pl.reciprocal(denom, approx=True)
        inv = inv * (2.0 - denom * inv)   # one Newton step -> near-exact 1/denom
        o_ref[0] = (acc_sc[...] * inv).astype(o_ref.dtype)


def _round_up(x, m):
    return ((x + m - 1) // m) * m


def _pick_tiling(S):
    """Return (S_pad, block_q, block_k)."""
    if S <= 256:
        return S, S, S                       # single block == full dims (always legal)
    S_pad = _round_up(S, 128)
    block_q = 256 if S_pad % 256 == 0 else 128
    if S_pad % 512 == 0:
        block_k = 512
    elif S_pad % 256 == 0:
        block_k = 256
    else:
        block_k = 128
    return S_pad, block_q, block_k


def dot_product_attention(Q, K, V, *, d_model, mask=False,
                          mxu_dtype=jnp.bfloat16):
    """Q, K, V: [..., S, D].  Returns softmax(Q K^T / sqrt(d_model) [,causal]) V.

    mxu_dtype: operand dtype fed to the MXU (bf16 by default for throughput;
    pass jnp.float32 for bit-closer parity with the f32 module).
    """
    orig_shape = Q.shape
    *lead, S, D = Q.shape
    B = int(np.prod(lead)) if lead else 1
    Qf = Q.reshape(B, S, D)
    Kf = K.reshape(B, S, D)
    Vf = V.reshape(B, S, D)

    S_pad, block_q, block_k = _pick_tiling(S)
    if S_pad != S:
        pad = ((0, 0), (0, S_pad - S), (0, 0))
        Qf = jnp.pad(Qf, pad)
        Kf = jnp.pad(Kf, pad)
        Vf = jnp.pad(Vf, pad)

    n_q = S_pad // block_q
    n_kv = S_pad // block_k
    scale = 1.0 / math.sqrt(d_model)   # module divides by sqrt(d_model), not sqrt(d_k)

    kernel = functools.partial(
        _flash_kernel, scale=scale, causal=bool(mask), block_q=block_q,
        block_k=block_k, seq_len=S, kv_padded=(S_pad != S), mxu_dtype=mxu_dtype)

    q_spec = pl.BlockSpec((1, block_q, D), lambda b, qi, ki: (b, qi, 0))
    kv_spec = pl.BlockSpec((1, block_k, D), lambda b, qi, ki: (b, ki, 0))
    o_spec = pl.BlockSpec((1, block_q, D), lambda b, qi, ki: (b, qi, 0))

    # Size scoped VMEM from the actual buffers (double-buffered Q/K/V/O, f32
    # scratch, scores/exp temporaries) with headroom; stays well under v7x's
    # 64 MiB physical VMEM.
    in_bytes = jnp.dtype(Q.dtype).itemsize
    vmem_bytes = (4 * block_q * D * in_bytes        # Q + O, double-buffered
                  + 4 * block_k * D * in_bytes      # K + V, double-buffered
                  + block_q * (D + 2) * 4           # acc / m / l scratch (f32)
                  + 4 * block_q * block_k * 4)      # scores / exp temporaries
    vmem_limit = int(min(64 << 20, max(2 * vmem_bytes + (4 << 20), 16 << 20)))

    out = pl.pallas_call(
        kernel,
        out_shape=jax.ShapeDtypeStruct((B, S_pad, D), Q.dtype),
        grid_spec=pltpu.PrefetchScalarGridSpec(
            num_scalar_prefetch=0,
            grid=(B, n_q, n_kv),
            in_specs=[q_spec, kv_spec, kv_spec],
            out_specs=o_spec,
            scratch_shapes=[
                pltpu.VMEM((block_q, 1), jnp.float32),   # running max  m
                pltpu.VMEM((block_q, 1), jnp.float32),   # running sum  l
                pltpu.VMEM((block_q, D), jnp.float32),   # output accumulator
            ]),
        compiler_params=pltpu.CompilerParams(
            dimension_semantics=("parallel", "parallel", "arbitrary"),
            vmem_limit_bytes=vmem_limit),
    )(Qf, Kf, Vf)

    if S_pad != S:
        out = out[:, :S, :]
    return out.reshape(orig_shape)


def _reference_sdpa(Q, K, V, *, d_model, mask=False):
    """Pure-JAX reference mirroring the PyTorch module exactly (f32)."""
    s = jnp.einsum("...qd,...kd->...qk", Q, K) / math.sqrt(d_model)
    if mask:
        S_q, S_k = s.shape[-2], s.shape[-1]
        tril = jnp.tril(jnp.ones((S_q, S_k)))
        s = jnp.where(tril == 0, -jnp.inf, s)
    p = jax.nn.softmax(s, axis=-1)
    return jnp.einsum("...qk,...kd->...qd", p, V)


if __name__ == "__main__":
    cases = [
        (2, 8, 32),      # small shape consistent with the module (batch=2, seq=8, d_model=32)
        (2, 320, 64),    # multi-block + padded-S shape: exercises the flash/KV tiling path
    ]
    key = jax.random.PRNGKey(0)
    for (B, S, D) in cases:
        key, kq, kk, kv = jax.random.split(key, 4)
        Q = jax.random.normal(kq, (B, S, D), jnp.float32)
        K = jax.random.normal(kk, (B, S, D), jnp.float32)
        V = jax.random.normal(kv, (B, S, D), jnp.float32)
        for use_mask in (False, True):
            ref = _reference_sdpa(Q, K, V, d_model=D, mask=use_mask)
            # f32 MXU path: tight parity with the module; bf16 path: fast path,
            # wider tolerance for bf16 operand rounding.
            for mxu_dtype, tol in ((jnp.float32, 2e-3), (jnp.bfloat16, 4e-2)):
                out = dot_product_attention(Q, K, V, d_model=D, mask=use_mask,
                                            mxu_dtype=mxu_dtype)
                out = jax.block_until_ready(out)
                assert out.shape == (B, S, D)
                err = float(jnp.max(jnp.abs(out - ref)))
                assert jnp.allclose(out, ref, atol=tol, rtol=tol), (
                    f"mismatch B={B} S={S} D={D} mask={use_mask} "
                    f"mxu={jnp.dtype(mxu_dtype).name}: max err {err}")
    print("KERNEL_OK")
</pallas_src>

<mosaic_0001>
module attributes {stable_mosaic.version = 11 : i64} {
  func.func @_flash_kernel(%arg0: i32, %arg1: i32, %arg2: i32, %arg3: memref<1x8x32xf32, #tpu.memory_space<vmem>>, %arg4: memref<1x8x32xf32, #tpu.memory_space<vmem>>, %arg5: memref<1x8x32xf32, #tpu.memory_space<vmem>>, %arg6: memref<1x8x32xf32, #tpu.memory_space<vmem>>, %arg7: memref<8x1xf32, #tpu.memory_space<vmem>>, %arg8: memref<8x1xf32, #tpu.memory_space<vmem>>, %arg9: memref<8x32xf32, #tpu.memory_space<vmem>>) attributes {dimension_semantics = [#tpu.dimension_semantics<parallel>, #tpu.dimension_semantics<parallel>, #tpu.dimension_semantics<arbitrary>], iteration_bounds = array<i64: 2, 1, 1>, scalar_prefetch = 0 : i64, scratch_operands = 3 : i64, tpu.core_type = #tpu.core_type<tc>, window_params = [{transform_indices = @transform_0, window_bounds = array<i64: 1, 8, 32>}, {transform_indices = @transform_1, window_bounds = array<i64: 1, 8, 32>}, {transform_indices = @transform_2, window_bounds = array<i64: 1, 8, 32>}, {transform_indices = @transform_3, window_bounds = array<i64: 1, 8, 32>}]} {
    %c0_i32 = arith.constant 0 : i32
    %0 = arith.cmpi eq, %arg2, %c0_i32 : i32
    %1 = arith.extui %0 : i1 to i32
    %c0_i32_0 = arith.constant 0 : i32
    %2 = arith.cmpi ne, %1, %c0_i32_0 : i32
    scf.if %2 {
      %cst_27 = arith.constant -1.70141173E+38 : f32
      %37 = vector.broadcast %cst_27 : f32 to vector<8x1xf32>
      %c0_28 = arith.constant 0 : index
      %c0_29 = arith.constant 0 : index
      %38 = vector.load %arg7[%c0_28, %c0_29] : memref<8x1xf32, #tpu.memory_space<vmem>>, vector<8x1xf32>
      tpu.vector_store %arg7[%c0_28, %c0_29], %37 {strides = array<i32>} : memref<8x1xf32, #tpu.memory_space<vmem>>, vector<8x1xf32>,
      %cst_30 = arith.constant 0.000000e+00 : f32
      %39 = vector.broadcast %cst_30 : f32 to vector<8x1xf32>
      %c0_31 = arith.constant 0 : index
      %c0_32 = arith.constant 0 : index
      %40 = vector.load %arg8[%c0_31, %c0_32] : memref<8x1xf32, #tpu.memory_space<vmem>>, vector<8x1xf32>
      tpu.vector_store %arg8[%c0_31, %c0_32], %39 {strides = array<i32>} : memref<8x1xf32, #tpu.memory_space<vmem>>, vector<8x1xf32>,
      %cst_33 = arith.constant 0.000000e+00 : f32
      %41 = vector.broadcast %cst_33 : f32 to vector<8x32xf32>
      %c0_34 = arith.constant 0 : index
      %c0_35 = arith.constant 0 : index
      %42 = vector.load %arg9[%c0_34, %c0_35] : memref<8x32xf32, #tpu.memory_space<vmem>>, vector<8x32xf32>
      tpu.vector_store %arg9[%c0_34, %c0_35], %41 {strides = array<i32>} : memref<8x32xf32, #tpu.memory_space<vmem>>, vector<8x32xf32>,
    } else {
    }
    %c0 = arith.constant 0 : index
    %c0_1 = arith.constant 0 : index
    %c0_2 = arith.constant 0 : index
    %3 = vector.load %arg3[%c0, %c0_1, %c0_2] : memref<1x8x32xf32, #tpu.memory_space<vmem>>, vector<1x8x32xf32>
    %4 = vector.shape_cast %3 : vector<1x8x32xf32> to vector<8x32xf32>
    %cst = arith.constant 0.176776692 : f32
    %5 = vector.broadcast %cst : f32 to vector<8x32xf32>
    %6 = arith.mulf %4, %5 : vector<8x32xf32>
    %c0_3 = arith.constant 0 : index
    %c0_4 = arith.constant 0 : index
    %c0_5 = arith.constant 0 : index
    %7 = vector.load %arg4[%c0_3, %c0_4, %c0_5] : memref<1x8x32xf32, #tpu.memory_space<vmem>>, vector<1x8x32xf32>
    %8 = vector.shape_cast %7 : vector<1x8x32xf32> to vector<8x32xf32>
    %cst_6 = arith.constant dense<0.000000e+00> : vector<8x8xf32>
    %9 = tpu.matmul %6, %8, %cst_6 {dimension_numbers = #tpu.dot_dimension_numbers<[1], [1], [0], [0], [0, 0, 1, 0], [], []>} : vector<8x32xf32>, vector<8x32xf32>, vector<8x8xf32> -> vector<8x8xf32>
    %c0_7 = arith.constant 0 : index
    %c0_8 = arith.constant 0 : index
    %10 = vector.load %arg7[%c0_7, %c0_8] : memref<8x1xf32, #tpu.memory_space<vmem>>, vector<8x1xf32>
    %cst_9 = arith.constant dense<0xFF800000> : vector<8xf32>
    %11 = vector.multi_reduction <maximumf>, %9, %cst_9 [1] : vector<8x8xf32> to vector<8xf32>
    %12 = vector.shape_cast %11 : vector<8xf32> to vector<8x1xf32>
    %13 = arith.maximumf %10, %12 : vector<8x1xf32>
    %14 = arith.subf %10, %13 : vector<8x1xf32>
    %15 = math.exp %14 : vector<8x1xf32>
    %16 = vector.broadcast %13 : vector<8x1xf32> to vector<8x8xf32>
    %17 = arith.subf %9, %16 : vector<8x8xf32>
    %18 = math.exp %17 : vector<8x8xf32>
    %c0_10 = arith.constant 0 : index
    %c0_11 = arith.constant 0 : index
    %19 = vector.load %arg8[%c0_10, %c0_11] : memref<8x1xf32, #tpu.memory_space<vmem>>, vector<8x1xf32>
    %20 = arith.mulf %15, %19 : vector<8x1xf32>
    %cst_12 = arith.constant dense<0.000000e+00> : vector<8xf32>
    %21 = vector.multi_reduction <add>, %18, %cst_12 [1] : vector<8x8xf32> to vector<8xf32>
    %22 = vector.shape_cast %21 : vector<8xf32> to vector<8x1xf32>
    %23 = arith.addf %20, %22 : vector<8x1xf32>
    %c0_13 = arith.constant 0 : index
    %c0_14 = arith.constant 0 : index
    %24 = vector.load %arg8[%c0_13, %c0_14] : memref<8x1xf32, #tpu.memory_space<vmem>>, vector<8x1xf32>
    tpu.vector_store %arg8[%c0_13, %c0_14], %23 {strides = array<i32>} : memref<8x1xf32, #tpu.memory_space<vmem>>, vector<8x1xf32>,
    %c0_15 = arith.constant 0 : index
    %c0_16 = arith.constant 0 : index
    %c0_17 = arith.constant 0 : index
    %25 = vector.load %arg5[%c0_15, %c0_16, %c0_17] : memref<1x8x32xf32, #tpu.memory_space<vmem>>, vector<1x8x32xf32>
    %26 = vector.shape_cast %25 : vector<1x8x32xf32> to vector<8x32xf32>
    %cst_18 = arith.constant dense<0.000000e+00> : vector<8x32xf32>
    %27 = tpu.matmul %18, %26, %cst_18 {dimension_numbers = #tpu.dot_dimension_numbers<[1], [0], [0], [1], [0, 0, 1, 1], [], []>} : vector<8x8xf32>, vector<8x32xf32>, vector<8x32xf32> -> vector<8x32xf32>
    %c0_19 = arith.constant 0 : index
    %c0_20 = arith.constant 0 : index
    %28 = vector.load %arg9[%c0_19, %c0_20] : memref<8x32xf32, #tpu.memory_space<vmem>>, vector<8x32xf32>
    %29 = vector.broadcast %15 : vector<8x1xf32> to vector<8x32xf32>
    %30 = arith.mulf %29, %28 : vector<8x32xf32>
    %31 = arith.addf %30, %27 : vector<8x32xf32>
    %c0_21 = arith.constant 0 : index
    %c0_22 = arith.constant 0 : index
    %32 = vector.load %arg9[%c0_21, %c0_22] : memref<8x32xf32, #tpu.memory_space<vmem>>, vector<8x32xf32>
    tpu.vector_store %arg9[%c0_21, %c0_22], %31 {strides = array<i32>} : memref<8x32xf32, #tpu.memory_space<vmem>>, vector<8x32xf32>,
    %c0_23 = arith.constant 0 : index
    %c0_24 = arith.constant 0 : index
    %33 = vector.load %arg7[%c0_23, %c0_24] : memref<8x1xf32, #tpu.memory_space<vmem>>, vector<8x1xf32>
    tpu.vector_store %arg7[%c0_23, %c0_24], %13 {strides = array<i32>} : memref<8x1xf32, #tpu.memory_space<vmem>>, vector<8x1xf32>,
    %c0_i32_25 = arith.constant 0 : i32
    %34 = arith.cmpi eq, %arg2, %c0_i32_25 : i32
    %35 = arith.extui %34 : i1 to i32
    %c0_i32_26 = arith.constant 0 : i32
    %36 = arith.cmpi ne, %35, %c0_i32_26 : i32
    scf.if %36 {
      %c0_27 = arith.constant 0 : index
      %c0_28 = arith.constant 0 : index
      %37 = vector.load %arg8[%c0_27, %c0_28] : memref<8x1xf32, #tpu.memory_space<vmem>>, vector<8x1xf32>
      %38 = tpu.reciprocal %37 {approx = true} : vector<8x1xf32> -> vector<8x1xf32>
      %39 = arith.mulf %37, %38 : vector<8x1xf32>
      %cst_29 = arith.constant 2.000000e+00 : f32
      %40 = vector.broadcast %cst_29 : f32 to vector<8x1xf32>
      %41 = arith.subf %40, %39 : vector<8x1xf32>
      %42 = arith.mulf %38, %41 : vector<8x1xf32>
      %c0_30 = arith.constant 0 : index
      %c0_31 = arith.constant 0 : index
      %43 = vector.load %arg9[%c0_30, %c0_31] : memref<8x32xf32, #tpu.memory_space<vmem>>, vector<8x32xf32>
      %44 = vector.broadcast %42 : vector<8x1xf32> to vector<8x32xf32>
      %45 = arith.mulf %43, %44 : vector<8x32xf32>
      %c0_32 = arith.constant 0 : index
      %c0_33 = arith.constant 0 : index
      %c0_34 = arith.constant 0 : index
      %46 = vector.load %arg6[%c0_32, %c0_33, %c0_34] : memref<1x8x32xf32, #tpu.memory_space<vmem>>, vector<1x8x32xf32>
      %47 = vector.shape_cast %46 : vector<1x8x32xf32> to vector<8x32xf32>
      %48 = vector.shape_cast %45 : vector<8x32xf32> to vector<1x8x32xf32>
      tpu.vector_store %arg6[%c0_32, %c0_33, %c0_34], %48 {strides = array<i32>} : memref<1x8x32xf32, #tpu.memory_space<vmem>>, vector<1x8x32xf32>,
    } else {
    }
    return
  }
  func.func @transform_0(%arg0: i32, %arg1: i32, %arg2: i32) -> (i32, i32, i32) {
    %c0_i32 = arith.constant 0 : i32
    %c0_i32_0 = arith.constant 0 : i32
    return %arg0, %arg1, %c0_i32 : i32, i32, i32
  }
  func.func @transform_1(%arg0: i32, %arg1: i32, %arg2: i32) -> (i32, i32, i32) {
    %c0_i32 = arith.constant 0 : i32
    %c0_i32_0 = arith.constant 0 : i32
    return %arg0, %arg2, %c0_i32 : i32, i32, i32
  }
  func.func @transform_2(%arg0: i32, %arg1: i32, %arg2: i32) -> (i32, i32, i32) {
    %c0_i32 = arith.constant 0 : i32
    %c0_i32_0 = arith.constant 0 : i32
    return %arg0, %arg2, %c0_i32 : i32, i32, i32
  }
  func.func @transform_3(%arg0: i32, %arg1: i32, %arg2: i32) -> (i32, i32, i32) {
    %c0_i32 = arith.constant 0 : i32
    %c0_i32_0 = arith.constant 0 : i32
    return %arg0, %arg1, %c0_i32 : i32, i32, i32
  }
}

</mosaic_0001>

<llo_original>
// kernel: tpu_custom_call.1
$region0: #{tpu_custom_call.1}
  #allocation0 [shape = 'u32[]', space=smem, size = 0x4, offset = 0x4, fixed_abs, tag = 'smem constant byte address 0x4 - core index']
  #allocation1 [shape = 'u32[144,128]{1,0:T(1,128)}', space=vmem, size = 0x12000, scoped, tag = 'internal scratch']
  #allocation2 [shape = 'f32[8,1]{1,0:T(8,128)}', space=vmem, size = 0x1000, scoped, tag = 'scratch operand']
  #allocation3 [shape = 'f32[8,1]{1,0:T(8,128)}', space=vmem, size = 0x1000, scoped, tag = 'scratch operand']
  #allocation4 [shape = 'f32[8,32]{1,0:T(8,128)}', space=vmem, size = 0x1000, scoped, tag = 'scratch operand']
  %s0 = inlined_call_operand.hbm [shape: f32[2,8,32], index: 0, kind: input, shape index: {}]
  %s1 = inlined_call_operand.hbm [shape: f32[2,8,32], index: 1, kind: input, shape index: {}]
  %s2 = inlined_call_operand.hbm [shape: f32[2,8,32], index: 2, kind: input, shape index: {}]
  %s3 = inlined_call_operand.hbm [shape: f32[2,8,32], index: 3, kind: output, shape index: {}]
  %s4 = sld [smem:[#allocation0]]
  $region65: #{tpu_custom_call.1} parent=0
    _
  %s6 = ssub.s32 1, %s4
  %s7 = scalar_select 0, %s6, %s4
  $region1: #{tpu_custom_call.1} parent=0
    #allocation5 [shape = 'u8[8192]{0}', space=vmem, size = 0x2000, scoped, tag = 'input window, operand 0']
    #allocation6 [shape = 's32[2]{0}', space=sflag, size = 0x8, scoped, tag = 'scoped memory for tpu_custom_call.1']
    #allocation7 [shape = 's32[2]{0}', space=sflag, size = 0x8, scoped, tag = 'scoped memory for tpu_custom_call.1']
    #allocation8 [shape = 'u8[8192]{0}', space=vmem, size = 0x2000, scoped, tag = 'input window, operand 1']
    #allocation9 [shape = 's32[2]{0}', space=sflag, size = 0x8, scoped, tag = 'scoped memory for tpu_custom_call.1']
    #allocation10 [shape = 'u8[8192]{0}', space=vmem, size = 0x2000, scoped, tag = 'input window, operand 2']
    #allocation11 [shape = 'u8[8192]{0}', space=vmem, size = 0x2000, scoped, tag = 'output window, operand 0']
    %8 = vsyncpa [#allocation6], 0
    %s9 = scalar_lea.sflag [#allocation6], 1
    %10 = vsyncpa %s9, 0
    %11 = vsyncpa [#allocation9], 0
    %s12 = scalar_lea.sflag [#allocation9], 1
    %13 = vsyncpa %s12, 0
    %14 = vsyncpa [#allocation7], 0
    %s15 = scalar_lea.sflag [#allocation7], 1
    %16 = vsyncpa %s15, 0
    loop: start=0, step=1, limit=4
    $region2: #{tpu_custom_call.1} parent=1 // loop_pre_header
      _
    $region3: #{tpu_custom_call.1} parent=1 // loop_header
      %s18 = sphi 0, %s22
      %p19 = scmp.ge.s32.totalorder %s18, 4
      %s25 = sphi 0, %s44
      %s26 = sphi 0, %s40
      %s27 = sphi 0, %s36
      %s28 = sphi 0, %s25
      %s29 = sphi 0, %s26
      %s30 = sphi 0, %s27
      %s31 = sphi 0, %s28
      %s32 = sphi 0, %s29
      %s33 = sphi 0, %s30
      %s49 = sphi 0, %s51
      %s52 = sphi 0, %s49
      %s53 = sphi 0, %s52
      %s69 = sphi 0, %s53
      %s77 = sphi 0, %s79
      %s80 = sphi 0, %s77
      %s81 = sphi 0, %s80
      %s97 = sphi 0, %s81
      %s105 = sphi 0, %s107
      %s108 = sphi 0, %s105
      %s109 = sphi 0, %s108
      %s125 = sphi 0, %s109
      %s133 = sphi 0, %s135
      %s136 = sphi 0, %s133
      %s137 = sphi 0, %s136
      %s153 = sphi 0, %s137
    $region4: #{tpu_custom_call.1} parent=1 // loop_header_branch
      %21 = sbr.rel (%p19) target = $region8
    $region5: #{tpu_custom_call.1} parent=1 // loop_body
      %s23 = ssub.s32 %s18, 1
      %s24 = ssub.s32 %s18, 2
      %s34 = sadd.s32 1, %s27
      %p35 = scmp.ge.s32.totalorder %s34, 1
      %s36 = scalar_select %p35, 0, %s34
      %s37 = sadd.s32 1, %s26
      %s38 = scalar_select %p35, %s37, %s26
      %p39 = scmp.ge.s32.totalorder %s38, 1
      %s40 = scalar_select %p39, 0, %s38
      %s41 = sadd.s32 1, %s25
      %s42 = scalar_select %p39, %s41, %s25
      %p43 = scmp.ge.s32.totalorder %s42, 2
      %s44 = scalar_select %p43, 0, %s42
      %s45 = ssub.s32 %s25, %s44
      %s46 = ssub.s32 %s26, %s40
      %s47 = sor.u32 %s45, %s46
      %p48 = scmp.eq.s32.totalorder %s47, 0
      %s50 = sadd.s32 %s49, 1
      %s51 = scalar_select %p48, %s49, %s50
      %p54 = pneg %p48
      %p55 = scmp.eq.s32.totalorder %s18, 1
      %p56 = por %p54, %p55
      %p57 = scmp.ne.s32.totalorder %s49, %s52
      %p58 = scmp.eq.s32.totalorder %s18, 0
      %p59 = por %p57, %p58
      %p60 = scmp.ne.s32.totalorder %s49, %s52
      %p61 = scmp.eq.s32.totalorder %s23, 1
      %p62 = por %p60, %p61
      %p63 = scmp.ne.s32.totalorder %s52, %s53
      %p64 = scmp.eq.s32.totalorder %s23, 0
      %p65 = por %p63, %p64
      %p66 = scmp.ne.s32.totalorder %s52, %s53
      %p67 = scmp.eq.s32.totalorder %s24, 1
      %p68 = por %p66, %p67
      %p70 = scmp.ne.s32.totalorder %s53, %s69
      %p71 = scmp.eq.s32.totalorder %s24, 0
      %p72 = por %p70, %p71
      %s73 = ssub.s32 %s25, %s44
      %s74 = ssub.s32 %s27, %s36
      %s75 = sor.u32 %s73, %s74
      %p76 = scmp.eq.s32.totalorder %s75, 0
      %s78 = sadd.s32 %s77, 1
      %s79 = scalar_select %p76, %s77, %s78
      %p82 = pneg %p76
      %p83 = scmp.eq.s32.totalorder %s18, 1
      %p84 = por %p82, %p83
      %p85 = scmp.ne.s32.totalorder %s77, %s80
      %p86 = scmp.eq.s32.totalorder %s18, 0
      %p87 = por %p85, %p86
      %p88 = scmp.ne.s32.totalorder %s77, %s80
      %p89 = scmp.eq.s32.totalorder %s23, 1
      %p90 = por %p88, %p89
      %p91 = scmp.ne.s32.totalorder %s80, %s81
      %p92 = scmp.eq.s32.totalorder %s23, 0
      %p93 = por %p91, %p92
      %p94 = scmp.ne.s32.totalorder %s80, %s81
      %p95 = scmp.eq.s32.totalorder %s24, 1
      %p96 = por %p94, %p95
      %p98 = scmp.ne.s32.totalorder %s81, %s97
      %p99 = scmp.eq.s32.totalorder %s24, 0
      %p100 = por %p98, %p99
      %s101 = ssub.s32 %s25, %s44
      %s102 = ssub.s32 %s27, %s36
      %s103 = sor.u32 %s101, %s102
      %p104 = scmp.eq.s32.totalorder %s103, 0
      %s106 = sadd.s32 %s105, 1
      %s107 = scalar_select %p104, %s105, %s106
      %p110 = pneg %p104
      %p111 = scmp.eq.s32.totalorder %s18, 1
      %p112 = por %p110, %p111
      %p113 = scmp.ne.s32.totalorder %s105, %s108
      %p114 = scmp.eq.s32.totalorder %s18, 0
      %p115 = por %p113, %p114
      %p116 = scmp.ne.s32.totalorder %s105, %s108
      %p117 = scmp.eq.s32.totalorder %s23, 1
      %p118 = por %p116, %p117
      %p119 = scmp.ne.s32.totalorder %s108, %s109
      %p120 = scmp.eq.s32.totalorder %s23, 0
      %p121 = por %p119, %p120
      %p122 = scmp.ne.s32.totalorder %s108, %s109
      %p123 = scmp.eq.s32.totalorder %s24, 1
      %p124 = por %p122, %p123
      %p126 = scmp.ne.s32.totalorder %s109, %s125
      %p127 = scmp.eq.s32.totalorder %s24, 0
      %p128 = por %p126, %p127
      %s129 = ssub.s32 %s25, %s44
      %s130 = ssub.s32 %s26, %s40
      %s131 = sor.u32 %s129, %s130
      %p132 = scmp.eq.s32.totalorder %s131, 0
      %s134 = sadd.s32 %s133, 1
      %s135 = scalar_select %p132, %s133, %s134
      %p138 = pneg %p132
      %p139 = scmp.eq.s32.totalorder %s18, 1
      %p140 = por %p138, %p139
      %p141 = scmp.ne.s32.totalorder %s133, %s136
      %p142 = scmp.eq.s32.totalorder %s18, 0
      %p143 = por %p141, %p142
      %p144 = scmp.ne.s32.totalorder %s133, %s136
      %p145 = scmp.eq.s32.totalorder %s23, 1
      %p146 = por %p144, %p145
      %p147 = scmp.ne.s32.totalorder %s136, %s137
      %p148 = scmp.eq.s32.totalorder %s23, 0
      %p149 = por %p147, %p148
      %p150 = scmp.ne.s32.totalorder %s136, %s137
      %p151 = scmp.eq.s32.totalorder %s24, 1
      %p152 = por %p150, %p151
      %p154 = scmp.ne.s32.totalorder %s137, %s153
      %p155 = scmp.eq.s32.totalorder %s24, 0
      %p156 = por %p154, %p155
      %p157 = scmp.le.s32.totalorder 1, %s18
      %p158 = scmp.lt.s32.totalorder %s18, 3
      %p159 = pnand %p157, %p158
      %p160 = pneg %p159
      // Predicated region
      $region9: #{tpu_custom_call.1} parent=5 // pred_check
        _
      $region10: #{tpu_custom_call.1} parent=5 // pred_check_branch
        %162 = sbr.rel (%p159) target = $region12
      $region11: #{tpu_custom_call.1} parent=5 // pred_region
        %s163 = ssub.s32 %s18, 1
      $region12: #{tpu_custom_call.1} parent=5 // pred_fallthru
        _
      %p164 = scmp.lt.s32.totalorder %s18, 2
      // Predicated region
      $region13: #{tpu_custom_call.1} parent=5 // pred_check
        %p165 = pneg %p164
      $region14: #{tpu_custom_call.1} parent=5 // pred_check_branch
        %167 = sbr.rel (%p165) target = $region16
      $region15: #{tpu_custom_call.1} parent=5 // pred_region
        // Predicated region
        $region17: #{tpu_custom_call.1} parent=15 // pred_check
          %p168 = pneg %p59
        $region18: #{tpu_custom_call.1} parent=15 // pred_check_branch
          %170 = sbr.rel (%p168) target = $region20
        $region19: #{tpu_custom_call.1} parent=15 // pred_region
          %s171 = sand.u32 %s49, 1
          %s172 = scalar_lea.sflag [#allocation6], %s171
          %s173 = sand.u32 %s49, 1
          %s174 = smul.addr %s173, 8
          %s175 = scalar_lea.vmem [#allocation5], %s174
          %s177 = ssub.s32 128, 128
          %178 = vsyncadd %s172, %s177
          %s179 = sadd.s32 %s26, %s25
          %s180 = smul.addr %s179, 128
          %s181 = scalar_lea.hbm %s0, %s180
          %s183 = sshll.u32 %s175, 4
          %s184 = int_to_ptr.vmem [resolvable:$true] %s183
          %186 = dma.hbm_to_vmem [thread:$0]  %s181, 128, %s184, %s172
        $region20: #{tpu_custom_call.1} parent=15 // pred_fallthru
          _
        // Predicated region
        $region21: #{tpu_custom_call.1} parent=15 // pred_check
          %p187 = pneg %p87
        $region22: #{tpu_custom_call.1} parent=15 // pred_check_branch
          %189 = sbr.rel (%p187) target = $region24
        $region23: #{tpu_custom_call.1} parent=15 // pred_region
          %s190 = sand.u32 %s18, 1
          %s191 = scalar_lea.sflag [#allocation9], %s190
          %s192 = sand.u32 %s77, 1
          %s193 = smul.addr %s192, 8
          %s194 = scalar_lea.vmem [#allocation8], %s193
          %s196 = ssub.s32 128, 128
          %197 = vsyncadd %s191, %s196
          %s198 = sadd.s32 %s27, %s25
          %s199 = smul.addr %s198, 128
          %s200 = scalar_lea.hbm %s1, %s199
          %s202 = sshll.u32 %s194, 4
          %s203 = int_to_ptr.vmem [resolvable:$true] %s202
          %205 = dma.hbm_to_vmem [thread:$0]  %s200, 128, %s203, %s191
        $region24: #{tpu_custom_call.1} parent=15 // pred_fallthru
          _
        // Predicated region
        $region25: #{tpu_custom_call.1} parent=15 // pred_check
          %p206 = pneg %p115
        $region26: #{tpu_custom_call.1} parent=15 // pred_check_branch
          %208 = sbr.rel (%p206) target = $region28
        $region27: #{tpu_custom_call.1} parent=15 // pred_region
          %s209 = sand.u32 %s18, 1
          %s210 = scalar_lea.sflag [#allocation9], %s209
          %s211 = sand.u32 %s105, 1
          %s212 = smul.addr %s211, 8
          %s213 = scalar_lea.vmem [#allocation10], %s212
          %s215 = ssub.s32 128, 128
          %216 = vsyncadd %s210, %s215
          %s217 = sadd.s32 %s27, %s25
          %s218 = smul.addr %s217, 128
          %s219 = scalar_lea.hbm %s2, %s218
          %s221 = sshll.u32 %s213, 4
          %s222 = int_to_ptr.vmem [resolvable:$true] %s221
          %224 = dma.hbm_to_vmem [thread:$0]  %s219, 128, %s222, %s210
        $region28: #{tpu_custom_call.1} parent=15 // pred_fallthru
          _
      $region16: #{tpu_custom_call.1} parent=5 // pred_fallthru
        _
      %p225 = scmp.le.s32.totalorder 1, %s18
      %p226 = scmp.lt.s32.totalorder %s18, 3
      %p227 = pnand %p225, %p226
      %p228 = pneg %p227
      // Predicated region
      $region29: #{tpu_custom_call.1} parent=5 // pred_check
        _
      $region30: #{tpu_custom_call.1} parent=5 // pred_check_branch
        %230 = sbr.rel (%p227) target = $region32
      $region31: #{tpu_custom_call.1} parent=5 // pred_region
        %s231 = ssub.s32 %s18, 1
        %s232 = sand.u32 %s52, 1
        %s233 = scalar_lea.sflag [#allocation6], %s232
        %s234 = sand.u32 %s52, 1
        %s235 = smul.addr %s234, 8
        %s236 = scalar_lea.vmem [#allocation5], %s235
        // Predicated region
        $region33: #{tpu_custom_call.1} parent=31 // pred_check
          %p237 = pneg %p65
        $region34: #{tpu_custom_call.1} parent=31 // pred_check_branch
          %239 = sbr.rel (%p237) target = $region36
        $region35: #{tpu_custom_call.1} parent=31 // pred_region
          %240 = dma.done %s233, 128
        $region36: #{tpu_custom_call.1} parent=31 // pred_fallthru
          _
        %s241 = sand.u32 %s23, 1
        %s242 = scalar_lea.sflag [#allocation9], %s241
        %s243 = sand.u32 %s80, 1
        %s244 = smul.addr %s243, 8
        %s245 = scalar_lea.vmem [#allocation8], %s244
        // Predicated region
        $region37: #{tpu_custom_call.1} parent=31 // pred_check
          %p246 = pneg %p93
        $region38: #{tpu_custom_call.1} parent=31 // pred_check_branch
          %248 = sbr.rel (%p246) target = $region40
        $region39: #{tpu_custom_call.1} parent=31 // pred_region
          %249 = dma.done %s242, 128
        $region40: #{tpu_custom_call.1} parent=31 // pred_fallthru
          _
        %s250 = sand.u32 %s23, 1
        %s251 = scalar_lea.sflag [#allocation9], %s250
        %s252 = sand.u32 %s108, 1
        %s253 = smul.addr %s252, 8
        %s254 = scalar_lea.vmem [#allocation10], %s253
        // Predicated region
        $region41: #{tpu_custom_call.1} parent=31 // pred_check
          %p255 = pneg %p121
        $region42: #{tpu_custom_call.1} parent=31 // pred_check_branch
          %257 = sbr.rel (%p255) target = $region44
        $region43: #{tpu_custom_call.1} parent=31 // pred_region
          %258 = dma.done %s251, 128
        $region44: #{tpu_custom_call.1} parent=31 // pred_fallthru
          _
        %s259 = sand.u32 %s52, 1
        %s260 = scalar_lea.sflag [#allocation6], %s259
        %s261 = sand.u32 %s52, 1
        %s262 = smul.addr %s261, 8
        %s263 = scalar_lea.vmem [#allocation5], %s262
        %p264 = pneg %p65
        %p265 = pneg %p62
        %s266 = sand.u32 %s23, 1
        %s267 = scalar_lea.sflag [#allocation9], %s266
        %s268 = sand.u32 %s80, 1
        %s269 = smul.addr %s268, 8
        %s270 = scalar_lea.vmem [#allocation8], %s269
        %p271 = pneg %p93
        %p272 = pneg %p90
        %s273 = sand.u32 %s23, 1
        %s274 = scalar_lea.sflag [#allocation9], %s273
        %s275 = sand.u32 %s108, 1
        %s276 = smul.addr %s275, 8
        %s277 = scalar_lea.vmem [#allocation10], %s276
        %p278 = pneg %p121
        %p279 = pneg %p118
        %p280 = pneg %p149
        %p281 = pneg %p146
        %s282 = sand.u32 %s136, 1
        %s283 = scalar_lea.sflag [#allocation7], %s282
        %s284 = sand.u32 %s136, 1
        %s285 = smul.addr %s284, 8
        %s286 = scalar_lea.vmem [#allocation11], %s285
        %p287 = scmp.eq.s32.totalorder %s30, 0
        // Predicated region
        $region45: #{tpu_custom_call.1} parent=31 // pred_check
          %p288 = pneg %p287
        $region46: #{tpu_custom_call.1} parent=31 // pred_check_branch
          %290 = sbr.rel (%p288) target = $region48
        $region47: #{tpu_custom_call.1} parent=31 // pred_region
          %vm291 = vcmask 7168
          %292 = vst.msk [vmem:[#allocation2] sm:$0xff] %vm291, -1.7014117e+38
          %293 = vst.msk [vmem:[#allocation3] sm:$0xff] %vm291, 0.0
          %vm294 = vcmask 261120
          %295 = vst.msk [vmem:[#allocation4] sm:$0xff] %vm294, 0.0
        $region48: #{tpu_custom_call.1} parent=31 // pred_fallthru
          _
        %v296 = vld [vmem:[%s236] sm:$0xff]
        %v297 = vmul.f32 %v296, 0.17677669
        %v298 = vld [vmem:[%s245] sm:$0xff]
        %vm299 = vcmask 261120
        %v301 = vsel %vm299, %v297, 0
        %v304 = vsel %vm299, %v298, 0
        %306 = vmatprep.subr.mxu0 0.0
        %307 = vmatpush1.xpose.msra.mxu0 0.0
        %308 = vmatprep.subr.mxu0 0.0
        %309 = vmatpush1.xpose.msra.mxu0 0.0
        %310 = vmatprep.subr.mxu0 0.0
        %311 = vmatpush1.xpose.msra.mxu0 0.0
        %312 = vmatprep.subr.mxu0 0.0
        %313 = vmatpush1.xpose.msra.mxu0 0.0
        %314 = vmatprep.subr.mxu0 0.0
        %315 = vmatpush1.xpose.msra.mxu0 0.0
        %316 = vmatprep.subr.mxu0 0.0
        %317 = vmatpush1.xpose.msra.mxu0 0.0
        %318 = vmatprep.subr.mxu0 0.0
        %319 = vmatpush1.xpose.msra.mxu0 0.0
        %320 = vmatprep.subr.mxu0 0.0
        %321 = vmatpush1.xpose.msra.mxu0 0.0
        %322 = vmatprep.subr.mxu0 0.0
        %323 = vmatpush1.xpose.msra.mxu0 0.0
        %324 = vmatprep.subr.mxu0 0.0
        %325 = vmatpush1.xpose.msra.mxu0 0.0
        %326 = vmatprep.subr.mxu0 0.0
        %327 = vmatpush1.xpose.msra.mxu0 0.0
        %328 = vmatprep.subr.mxu0 0.0
        %329 = vmatpush1.xpose.msra.mxu0 0.0
        %330 = vmatprep.subr.mxu0 0.0
        %331 = vmatpush1.xpose.msra.mxu0 0.0
        %332 = vmatprep.subr.mxu0 0.0
        %333 = vmatpush1.xpose.msra.mxu0 0.0
        %334 = vmatprep.subr.mxu0 0.0
        %335 = vmatpush1.xpose.msra.mxu0 0.0
        %336 = vmatprep.subr.mxu0 0.0
        %337 = vmatpush1.xpose.msra.mxu0 %v304
        %338 = vmatprep.subr.mxu0 0.0
        %339 = vmatpush2.xpose.msra.mxu0 0.0
        %340 = vmatprep.subr.mxu0 0.0
        %341 = vmatpush2.xpose.msra.mxu0 0.0
        %342 = vmatprep.subr.mxu0 0.0
        %343 = vmatpush2.xpose.msra.mxu0 0.0
        %344 = vmatprep.subr.mxu0 0.0
        %345 = vmatpush2.xpose.msra.mxu0 0.0
        %346 = vmatprep.subr.mxu0 0.0
        %347 = vmatpush2.xpose.msra.mxu0 0.0
        %348 = vmatprep.subr.mxu0 0.0
        %349 = vmatpush2.xpose.msra.mxu0 0.0
        %350 = vmatprep.subr.mxu0 0.0
        %351 = vmatpush2.xpose.msra.mxu0 0.0
        %352 = vmatprep.subr.mxu0 0.0
        %353 = vmatpush2.xpose.msra.mxu0 0.0
        %354 = vmatprep.subr.mxu0 0.0
        %355 = vmatpush2.xpose.msra.mxu0 0.0
        %356 = vmatprep.subr.mxu0 0.0
        %357 = vmatpush2.xpose.msra.mxu0 0.0
        %358 = vmatprep.subr.mxu0 0.0
        %359 = vmatpush2.xpose.msra.mxu0 0.0
        %360 = vmatprep.subr.mxu0 0.0
        %361 = vmatpush2.xpose.msra.mxu0 0.0
        %362 = vmatprep.subr.mxu0 0.0
        %363 = vmatpush2.xpose.msra.mxu0 0.0
        %364 = vmatprep.subr.mxu0 0.0
        %365 = vmatpush2.xpose.msra.mxu0 0.0
        %366 = vmatprep.subr.mxu0 0.0
        %367 = vmatpush2.xpose.msra.mxu0 0.0
        %368 = vmatprep.subr.mxu0 0.0
        %369 = vmatpush2.xpose.msra.mxu0 0.0
        %370 = vmatprep.mubr.f32.mxu0 0.0
        %371 = vmatmul.mubr.f32.gmra.mxu0 %v301
        %v372 = vpop.f32.mrf.mxu0
        %v373 = vadd.f32 0.0, %v372
        %v374 = vpop.f32.mrf.mxu0
        %375 = vdwg.mxu0
        %v376 = vld [vmem:[#allocation2] sm:$0xff]
        %vm377 = vcmask 64512
        %v378 = vsel %vm377, %v373, -inf
        %379 = vmax.xlane.f32.xlu0 %v378
        %v380 = vpop.xlane.xlu0 %379
        %v381 = vmax.f32 %v376, %v380
        %v382 = vsub.f32 %v376, %v381
        %v383 = vmul.f32 %v382, 1.442695
        %v384 = vpow.pop %v383
        %386 = vset.pattern.permute.xlu0 0
        %387 = vperm.xlu0 %386, %v381
        %v388 = vpop.permute.xlu0 %387
        %v390 = vsub.f32 %v373, %v388
        %v391 = vmul.f32 %v390, 1.442695
        %v392 = vpow.pop %v391
        %v393 = vld [vmem:[#allocation3] sm:$0xff]
        %v394 = vmul.f32 %v384, %v393
        %v395 = vsel %vm377, %v392, 0.0
        %396 = vadd.xlane.f32.xlu0 %v395
        %v397 = vpop.xlane.xlu0 %396
        %v398 = vadd.f32 %v394, %v397
        %vm399 = vcmask 7168
        %400 = vst.msk [vmem:[#allocation3] sm:$0xff] %vm399, %v398
        %v401 = vld [vmem:[%s254] sm:$0xff]
        %v403 = vsel %vm377, %v392, 0
        %405 = vmatprep.subr.mxu0 0.0
        %406 = vmatpush1.msra.mxu0 0.0
        %407 = vmatprep.subr.mxu0 0.0
        %408 = vmatpush1.msra.mxu0 0.0
        %409 = vmatprep.subr.mxu0 0.0
        %410 = vmatpush1.msra.mxu0 0.0
        %411 = vmatprep.subr.mxu0 0.0
        %412 = vmatpush1.msra.mxu0 0.0
        %413 = vmatprep.subr.mxu0 0.0
        %414 = vmatpush1.msra.mxu0 0.0
        %415 = vmatprep.subr.mxu0 0.0
        %416 = vmatpush1.msra.mxu0 0.0
        %417 = vmatprep.subr.mxu0 0.0
        %418 = vmatpush1.msra.mxu0 0.0
        %419 = vmatprep.subr.mxu0 0.0
        %420 = vmatpush1.msra.mxu0 0.0
        %421 = vmatprep.subr.mxu0 0.0
        %422 = vmatpush1.msra.mxu0 0.0
        %423 = vmatprep.subr.mxu0 0.0
        %424 = vmatpush1.msra.mxu0 0.0
        %425 = vmatprep.subr.mxu0 0.0
        %426 = vmatpush1.msra.mxu0 0.0
        %427 = vmatprep.subr.mxu0 0.0
        %428 = vmatpush1.msra.mxu0 0.0
        %429 = vmatprep.subr.mxu0 0.0
        %430 = vmatpush1.msra.mxu0 0.0
        %431 = vmatprep.subr.mxu0 0.0
        %432 = vmatpush1.msra.mxu0 0.0
        %433 = vmatprep.subr.mxu0 0.0
        %434 = vmatpush1.msra.mxu0 0.0
        %435 = vmatprep.subr.mxu0 0.0
        %436 = vmatpush1.msra.mxu0 %v401
        %437 = vmatprep.subr.mxu0 0.0
        %438 = vmatpush2.msra.mxu0 0.0
        %439 = vmatprep.subr.mxu0 0.0
        %440 = vmatpush2.msra.mxu0 0.0
        %441 = vmatprep.subr.mxu0 0.0
        %442 = vmatpush2.msra.mxu0 0.0
        %443 = vmatprep.subr.mxu0 0.0
        %444 = vmatpush2.msra.mxu0 0.0
        %445 = vmatprep.subr.mxu0 0.0
        %446 = vmatpush2.msra.mxu0 0.0
        %447 = vmatprep.subr.mxu0 0.0
        %448 = vmatpush2.msra.mxu0 0.0
        %449 = vmatprep.subr.mxu0 0.0
        %450 = vmatpush2.msra.mxu0 0.0
        %451 = vmatprep.subr.mxu0 0.0
        %452 = vmatpush2.msra.mxu0 0.0
        %453 = vmatprep.subr.mxu0 0.0
        %454 = vmatpush2.msra.mxu0 0.0
        %455 = vmatprep.subr.mxu0 0.0
        %456 = vmatpush2.msra.mxu0 0.0
        %457 = vmatprep.subr.mxu0 0.0
        %458 = vmatpush2.msra.mxu0 0.0
        %459 = vmatprep.subr.mxu0 0.0
        %460 = vmatpush2.msra.mxu0 0.0
        %461 = vmatprep.subr.mxu0 0.0
        %462 = vmatpush2.msra.mxu0 0.0
        %463 = vmatprep.subr.mxu0 0.0
        %464 = vmatpush2.msra.mxu0 0.0
        %465 = vmatprep.subr.mxu0 0.0
        %466 = vmatpush2.msra.mxu0 0.0
        %467 = vmatprep.subr.mxu0 0.0
        %468 = vmatpush2.msra.mxu0 0.0
        %469 = vmatprep.mubr.f32.mxu0 0.0
        %470 = vmatmul.mubr.f32.gmra.mxu0 %v403
        %v471 = vpop.f32.mrf.mxu0
        %v472 = vadd.f32 0.0, %v471
        %v473 = vpop.f32.mrf.mxu0
        %474 = vdwg.mxu0
        %v475 = vld [vmem:[#allocation4] sm:$0xff]
        %477 = vset.pattern.permute.xlu0 0
        %478 = vperm.xlu0 %477, %v384
        %v479 = vpop.permute.xlu0 %478
        %v481 = vmul.f32 %v479, %v475
        %v482 = vadd.f32 %v481, %v472
        %483 = vst.msk [vmem:[#allocation4] sm:$0xff] %vm299, %v482
        %484 = vst.msk [vmem:[#allocation2] sm:$0xff] %vm399, %v381
        // Predicated region
        $region49: #{tpu_custom_call.1} parent=31 // pred_check
          %p485 = pneg %p287
        $region50: #{tpu_custom_call.1} parent=31 // pred_check_branch
          %487 = sbr.rel (%p485) target = $region52
        $region51: #{tpu_custom_call.1} parent=31 // pred_region
          %v488 = vld [vmem:[#allocation3] sm:$0xff]
          %v489 = vrcp.pop %v488
          %v490 = vmul.f32 %v488, %v489
          %v491 = vsub.f32 2.0, %v490
          %v492 = vmul.f32 %v489, %v491
          %v493 = vld [vmem:[#allocation4] sm:$0xff]
          %495 = vset.pattern.permute.xlu0 0
          %496 = vperm.xlu0 %495, %v492
          %v497 = vpop.permute.xlu0 %496
          %v499 = vmul.f32 %v493, %v497
          %500 = vst.msk [vmem:[%s286] sm:$0xff] %vm299, %v499
        $region52: #{tpu_custom_call.1} parent=31 // pred_fallthru
          _
        %s501 = sand.u32 %s136, 1
        %s502 = scalar_lea.sflag [#allocation7], %s501
        %s503 = sand.u32 %s136, 1
        %s504 = smul.addr %s503, 8
        %s505 = scalar_lea.vmem [#allocation11], %s504
        // Predicated region
        $region53: #{tpu_custom_call.1} parent=31 // pred_check
          %p506 = pneg %p146
        $region54: #{tpu_custom_call.1} parent=31 // pred_check_branch
          %508 = sbr.rel (%p506) target = $region56
        $region55: #{tpu_custom_call.1} parent=31 // pred_region
          %s510 = ssub.s32 128, 128
          %511 = vsyncadd %s502, %s510
          %s512 = sadd.s32 %s29, %s28
          %s513 = smul.addr %s512, 128
          %s514 = scalar_lea.hbm %s3, %s513
          %s516 = sshll.u32 %s505, 4
          %s517 = int_to_ptr.vmem [resolvable:$true] %s516
          %519 = dma.vmem_to_hbm [thread:$0]  %s517, 128, %s514, %s502
        $region56: #{tpu_custom_call.1} parent=31 // pred_fallthru
          _
      $region32: #{tpu_custom_call.1} parent=5 // pred_fallthru
        _
      %p520 = scmp.le.s32.totalorder 2, %s18
      // Predicated region
      $region57: #{tpu_custom_call.1} parent=5 // pred_check
        %p521 = pneg %p520
      $region58: #{tpu_custom_call.1} parent=5 // pred_check_branch
        %523 = sbr.rel (%p521) target = $region60
      $region59: #{tpu_custom_call.1} parent=5 // pred_region
        %s524 = ssub.s32 %s18, 2
        // Predicated region
        $region61: #{tpu_custom_call.1} parent=59 // pred_check
          %p525 = pneg %p152
        $region62: #{tpu_custom_call.1} parent=59 // pred_check_branch
          %527 = sbr.rel (%p525) target = $region64
        $region63: #{tpu_custom_call.1} parent=59 // pred_region
          %s528 = sand.u32 %s137, 1
          %s529 = scalar_lea.sflag [#allocation7], %s528
          %s530 = sand.u32 %s137, 1
          %s531 = smul.addr %s530, 8
          %s532 = scalar_lea.vmem [#allocation11], %s531
          %533 = dma.done %s529, 128
        $region64: #{tpu_custom_call.1} parent=59 // pred_fallthru
          _
      $region60: #{tpu_custom_call.1} parent=5 // pred_fallthru
        _
    $region6: #{tpu_custom_call.1} parent=1 // loop_footer
      %s22 = sadd.s32 1, %s18
    $region7: #{tpu_custom_call.1} parent=1 // loop_footer_branch
      %17 = sbr.rel target = $region3
    $region8: #{tpu_custom_call.1} parent=1 // loop_exit
      _
    %534 = vsyncpa [#allocation6], 1
    %s535 = scalar_lea.sflag [#allocation6], 1
    %536 = vsyncpa %s535, 1
    %537 = vsyncpa [#allocation9], 1
    %s538 = scalar_lea.sflag [#allocation9], 1
    %539 = vsyncpa %s538, 1
    %540 = vsyncpa [#allocation7], 1
    %s541 = scalar_lea.sflag [#allocation7], 1
    %542 = vsyncpa %s541, 1

</llo_original>
